<compile_context>
chip_gen: v6e
topology: v6e:2x2x1
jax: 0.10.0
libtpu: 0.0.40
codegen_flags: <defaults>
</compile_context>

<pallas_src>
import functools

import jax
import jax.numpy as jnp
from jax.experimental import pallas as pl
from jax.experimental.pallas import tpu as pltpu


def _mlp_kernel(x_ref, w1_ref, b1_ref, w2_ref, b2_ref, w3_ref, b3_ref, o_ref):
    # x:  (7, TB)        batch on lanes
    # w1: (128, 7)   b1: (128, 1)
    # w2: (64, 128)  b2: (64, 1)
    # w3: (64, 1)    b3: (1,)  in SMEM
    # o:  (1, TB)        lane-dense output
    x = x_ref[...]

    h1 = jnp.dot(w1_ref[...], x, preferred_element_type=jnp.float32) + b1_ref[...]
    h1 = jnp.maximum(h1, 0.0)

    h2 = jnp.dot(w2_ref[...], h1, preferred_element_type=jnp.float32) + b2_ref[...]
    h2 = jnp.maximum(h2, 0.0)

    # Final 64 -> 1 layer: VPU multiply + sublane (XLU) reduce; keeps the MXU
    # free and avoids a vmatmul/vpop for a 1-column result.
    out = jnp.sum(h2 * w3_ref[...], axis=0, keepdims=True) + b3_ref[0]
    o_ref[...] = out.astype(o_ref.dtype)


@functools.partial(jax.jit, static_argnames=("tile_b",))
def unicycle_value_function(observations, params, tile_b=512):
    """observations: (..., 7) float32 -> (..., 1) float32."""
    w1, b1, w2, b2, w3, b3 = params
    assert tile_b % 128 == 0, "tile_b must be a multiple of 128 (lane width)"

    lead_shape = observations.shape[:-1]
    feat = observations.shape[-1]
    assert feat == w1.shape[1], "feature dim must match Linear(7, 128)"

    x = observations.reshape(-1, feat)  # (B, 7)
    b = x.shape[0]
    x_t = x.T                            # (7, B): batch on lanes, lane-dense

    if b > tile_b:
        tb = tile_b                      # multiple of 128; last block is ragged
    else:
        tb = b                           # single block == full array dims
    grid = (pl.cdiv(b, tb),)

    out_t = pl.pallas_call(
        _mlp_kernel,
        out_shape=jax.ShapeDtypeStruct((1, b), jnp.float32),
        grid_spec=pltpu.PrefetchScalarGridSpec(
            num_scalar_prefetch=0,
            grid=grid,
            in_specs=[
                pl.BlockSpec((feat, tb), lambda i: (0, i)),    # x tile (7, TB)
                pl.BlockSpec((128, feat), lambda i: (0, 0)),   # w1 (out, in)
                pl.BlockSpec((128, 1), lambda i: (0, 0)),      # b1 column
                pl.BlockSpec((64, 128), lambda i: (0, 0)),     # w2
                pl.BlockSpec((64, 1), lambda i: (0, 0)),       # b2 column
                pl.BlockSpec((64, 1), lambda i: (0, 0)),       # w3 column
                pl.BlockSpec(memory_space=pltpu.MemorySpace.SMEM),  # b3 scalar
            ],
            out_specs=pl.BlockSpec((1, tb), lambda i: (0, i)),  # lane-dense out
        ),
        compiler_params=pltpu.CompilerParams(
            dimension_semantics=("parallel",),
        ),
    )(x_t, w1, b1, w2, b2, w3, b3)

    # (1, B) -> (..., 1)
    return out_t.reshape(*lead_shape, 1)


def init_params(key):
    """PyTorch-style nn.Linear init (uniform +/- 1/sqrt(fan_in)).

    Layout chosen for the transposed (batch-on-lanes) kernel:
      w1: (128, 7)   == PyTorch Linear(7, 128).weight  (out, in)
      b1: (128, 1)   column bias
      w2: (64, 128)
      b2: (64, 1)
      w3: (64, 1)    == PyTorch Linear(64, 1).weight transposed to a column
      b3: (1,)       scalar bias (lives in SMEM)
    """
    k1w, k1b, k2w, k2b, k3w, k3b = jax.random.split(key, 6)

    def u(k, shape, fan_in):
        bound = 1.0 / jnp.sqrt(float(fan_in))
        return jax.random.uniform(k, shape, jnp.float32, -bound, bound)

    w1 = u(k1w, (128, 7), 7)
    b1 = u(k1b, (128, 1), 7)
    w2 = u(k2w, (64, 128), 128)
    b2 = u(k2b, (64, 1), 128)
    w3 = u(k3w, (64, 1), 64)
    b3 = u(k3b, (1,), 64)
    return (w1, b1, w2, b2, w3, b3)


def _reference_mlp(x, params):
    w1, b1, w2, b2, w3, b3 = params
    h1 = jnp.maximum(x @ w1.T + b1[:, 0], 0.0)
    h2 = jnp.maximum(h1 @ w2.T + b2[:, 0], 0.0)
    return h2 @ w3 + b3


if __name__ == "__main__":
    key = jax.random.PRNGKey(0)
    k_obs, k_params = jax.random.split(key)
    params = init_params(k_params)

    # Small check (single-tile path): observations (2, 8, 7)
    observations = jax.random.normal(k_obs, (2, 8, 7), jnp.float32)
    out = jax.block_until_ready(unicycle_value_function(observations, params))
    ref = _reference_mlp(observations.reshape(-1, 7), params).reshape(2, 8, 1)
    assert out.shape == (2, 8, 1), out.shape
    assert jnp.allclose(out, ref, atol=1e-5, rtol=1e-5), "mismatch vs reference (small)"

    # Larger check exercising the multi-tile grid + ragged last block (no pad).
    big = jax.random.normal(jax.random.PRNGKey(1), (3, 700, 7), jnp.float32)
    out_big = jax.block_until_ready(unicycle_value_function(big, params))
    ref_big = _reference_mlp(big.reshape(-1, 7), params).reshape(3, 700, 1)
    assert out_big.shape == (3, 700, 1), out_big.shape
    assert jnp.allclose(out_big, ref_big, atol=1e-4, rtol=1e-4), "mismatch vs reference (big)"

    print("KERNEL_OK")
</pallas_src>

<mosaic_0001>
module attributes {stable_mosaic.version = 11 : i64} {
  func.func @_mlp_kernel(%arg0: i32, %arg1: memref<7x16xf32, #tpu.memory_space<vmem>>, %arg2: memref<128x7xf32, #tpu.memory_space<vmem>>, %arg3: memref<128x1xf32, #tpu.memory_space<vmem>>, %arg4: memref<64x128xf32, #tpu.memory_space<vmem>>, %arg5: memref<64x1xf32, #tpu.memory_space<vmem>>, %arg6: memref<64x1xf32, #tpu.memory_space<vmem>>, %arg7: memref<1xf32, #tpu.memory_space<smem>>, %arg8: memref<1x16xf32, #tpu.memory_space<vmem>>) attributes {dimension_semantics = [#tpu.dimension_semantics<parallel>], iteration_bounds = array<i64: 1>, scalar_prefetch = 0 : i64, scratch_operands = 0 : i64, tpu.core_type = #tpu.core_type<tc>, window_params = [{transform_indices = @transform_0, window_bounds = array<i64: 7, 16>}, {pipeline_mode = #tpu.pipeline_mode<synchronous>, transform_indices = @transform_1, window_bounds = array<i64: 128, 7>}, {pipeline_mode = #tpu.pipeline_mode<synchronous>, transform_indices = @transform_2, window_bounds = array<i64: 128, 1>}, {pipeline_mode = #tpu.pipeline_mode<synchronous>, transform_indices = @transform_3, window_bounds = array<i64: 64, 128>}, {pipeline_mode = #tpu.pipeline_mode<synchronous>, transform_indices = @transform_4, window_bounds = array<i64: 64, 1>}, {pipeline_mode = #tpu.pipeline_mode<synchronous>, transform_indices = @transform_5, window_bounds = array<i64: 64, 1>}, {transform_indices = @transform_6, window_bounds = array<i64: 1>}, {transform_indices = @transform_7, window_bounds = array<i64: 1, 16>}]} {
    %c0 = arith.constant 0 : index
    %c0_0 = arith.constant 0 : index
    %0 = vector.load %arg1[%c0, %c0_0] : memref<7x16xf32, #tpu.memory_space<vmem>>, vector<7x16xf32>
    %c0_1 = arith.constant 0 : index
    %c0_2 = arith.constant 0 : index
    %1 = vector.load %arg2[%c0_1, %c0_2] : memref<128x7xf32, #tpu.memory_space<vmem>>, vector<128x7xf32>
    %cst = arith.constant dense<0.000000e+00> : vector<128x16xf32>
    %2 = tpu.matmul %1, %0, %cst {dimension_numbers = #tpu.dot_dimension_numbers<[1], [0], [0], [1], [0, 0, 1, 1], [], []>} : vector<128x7xf32>, vector<7x16xf32>, vector<128x16xf32> -> vector<128x16xf32>
    %c0_3 = arith.constant 0 : index
    %c0_4 = arith.constant 0 : index
    %3 = vector.load %arg3[%c0_3, %c0_4] : memref<128x1xf32, #tpu.memory_space<vmem>>, vector<128x1xf32>
    %4 = vector.broadcast %3 : vector<128x1xf32> to vector<128x16xf32>
    %5 = arith.addf %2, %4 : vector<128x16xf32>
    %cst_5 = arith.constant 0.000000e+00 : f32
    %6 = vector.broadcast %cst_5 : f32 to vector<128x16xf32>
    %7 = arith.maximumf %5, %6 : vector<128x16xf32>
    %c0_6 = arith.constant 0 : index
    %c0_7 = arith.constant 0 : index
    %8 = vector.load %arg4[%c0_6, %c0_7] : memref<64x128xf32, #tpu.memory_space<vmem>>, vector<64x128xf32>
    %cst_8 = arith.constant dense<0.000000e+00> : vector<64x16xf32>
    %9 = tpu.matmul %8, %7, %cst_8 {dimension_numbers = #tpu.dot_dimension_numbers<[1], [0], [0], [1], [0, 0, 1, 1], [], []>} : vector<64x128xf32>, vector<128x16xf32>, vector<64x16xf32> -> vector<64x16xf32>
    %c0_9 = arith.constant 0 : index
    %c0_10 = arith.constant 0 : index
    %10 = vector.load %arg5[%c0_9, %c0_10] : memref<64x1xf32, #tpu.memory_space<vmem>>, vector<64x1xf32>
    %11 = vector.broadcast %10 : vector<64x1xf32> to vector<64x16xf32>
    %12 = arith.addf %9, %11 : vector<64x16xf32>
    %cst_11 = arith.constant 0.000000e+00 : f32
    %13 = vector.broadcast %cst_11 : f32 to vector<64x16xf32>
    %14 = arith.maximumf %12, %13 : vector<64x16xf32>
    %c0_12 = arith.constant 0 : index
    %c0_13 = arith.constant 0 : index
    %15 = vector.load %arg6[%c0_12, %c0_13] : memref<64x1xf32, #tpu.memory_space<vmem>>, vector<64x1xf32>
    %16 = vector.broadcast %15 : vector<64x1xf32> to vector<64x16xf32>
    %17 = arith.mulf %14, %16 : vector<64x16xf32>
    %cst_14 = arith.constant dense<0.000000e+00> : vector<16xf32>
    %18 = vector.multi_reduction <add>, %17, %cst_14 [0] : vector<64x16xf32> to vector<16xf32>
    %19 = vector.shape_cast %18 : vector<16xf32> to vector<1x16xf32>
    %c0_15 = arith.constant 0 : index
    %20 = memref.load %arg7[%c0_15] : memref<1xf32, #tpu.memory_space<smem>>
    %21 = vector.broadcast %20 : f32 to vector<1x16xf32>
    %22 = arith.addf %19, %21 : vector<1x16xf32>
    %c0_16 = arith.constant 0 : index
    %c0_17 = arith.constant 0 : index
    %23 = vector.load %arg8[%c0_16, %c0_17] : memref<1x16xf32, #tpu.memory_space<vmem>>, vector<1x16xf32>
    tpu.vector_store %arg8[%c0_16, %c0_17], %22 {strides = array<i32>} : memref<1x16xf32, #tpu.memory_space<vmem>>, vector<1x16xf32>,
    return
  }
  func.func @transform_0(%arg0: i32) -> (i32, i32) {
    %c0_i32 = arith.constant 0 : i32
    %c0_i32_0 = arith.constant 0 : i32
    return %c0_i32, %arg0 : i32, i32
  }
  func.func @transform_1(%arg0: i32) -> (i32, i32) {
    %c0_i32 = arith.constant 0 : i32
    %c0_i32_0 = arith.constant 0 : i32
    %c0_i32_1 = arith.constant 0 : i32
    return %c0_i32, %c0_i32_0 : i32, i32
  }
  func.func @transform_2(%arg0: i32) -> (i32, i32) {
    %c0_i32 = arith.constant 0 : i32
    %c0_i32_0 = arith.constant 0 : i32
    %c0_i32_1 = arith.constant 0 : i32
    return %c0_i32, %c0_i32_0 : i32, i32
  }
  func.func @transform_3(%arg0: i32) -> (i32, i32) {
    %c0_i32 = arith.constant 0 : i32
    %c0_i32_0 = arith.constant 0 : i32
    %c0_i32_1 = arith.constant 0 : i32
    return %c0_i32, %c0_i32_0 : i32, i32
  }
  func.func @transform_4(%arg0: i32) -> (i32, i32) {
    %c0_i32 = arith.constant 0 : i32
    %c0_i32_0 = arith.constant 0 : i32
    %c0_i32_1 = arith.constant 0 : i32
    return %c0_i32, %c0_i32_0 : i32, i32
  }
  func.func @transform_5(%arg0: i32) -> (i32, i32) {
    %c0_i32 = arith.constant 0 : i32
    %c0_i32_0 = arith.constant 0 : i32
    %c0_i32_1 = arith.constant 0 : i32
    return %c0_i32, %c0_i32_0 : i32, i32
  }
  func.func @transform_6(%arg0: i32) -> i32 {
    %c0_i32 = arith.constant 0 : i32
    %c0_i32_0 = arith.constant 0 : i32
    return %c0_i32 : i32
  }
  func.func @transform_7(%arg0: i32) -> (i32, i32) {
    %c0_i32 = arith.constant 0 : i32
    %c0_i32_0 = arith.constant 0 : i32
    return %c0_i32, %arg0 : i32, i32
  }
}

</mosaic_0001>

<llo_original>
// kernel: unicycle_value_function.1
$region0: #{unicycle_value_function.1}
  #allocation0 [shape = 'u32[]', space=smem, size = 0x4, offset = 0x4, fixed_abs, tag = 'smem constant byte address 0x4 - core index']
  #allocation1 [shape = 'u32[144,128]{1,0:T(1,128)}', space=vmem, size = 0x12000, scoped, tag = 'internal scratch']
  #allocation2 [shape = 'f32[1]{0:T(128)S(6)}', space=smem, size = 0x200, scoped, tag = 'scoped memory for unicycle_value_function.1']
  %s0 = inlined_call_operand.vmem [shape: f32[7,16], index: 0, kind: input, shape index: {}]
  %s1 = inlined_call_operand.vmem [shape: f32[128,7], index: 1, kind: input, shape index: {}]
  %s2 = inlined_call_operand.vmem [shape: f32[128,1], index: 2, kind: input, shape index: {}]
  %s3 = inlined_call_operand.vmem [shape: f32[64,128], index: 3, kind: input, shape index: {}]
  %s4 = inlined_call_operand.vmem [shape: f32[64,1], index: 4, kind: input, shape index: {}]
  %s5 = inlined_call_operand.vmem [shape: f32[64,1], index: 5, kind: input, shape index: {}]
  %s6 = inlined_call_operand.<no memory space> [shape: f32[1], index: 6, kind: input, shape index: {}]
  %s7 = inlined_call_operand.vmem [shape: f32[1,16], index: 7, kind: output, shape index: {}]
  %s8 = sld [smem:[#allocation0]]
  $region38: #{unicycle_value_function.1} parent=0
    _
  %s10 = ssub.s32 1, %s8
  %s11 = scalar_select 0, %s10, %s8
  %12 = sst [smem:[#allocation2]] %s6
  // Predicated region
  $region2: #{unicycle_value_function.1} parent=0 // pred_check
    _
  $region3: #{unicycle_value_function.1} parent=0 // pred_check_branch
    %14 = sbr.rel (0) target = $region5
  $region4: #{unicycle_value_function.1} parent=0 // pred_region
    _
  $region5: #{unicycle_value_function.1} parent=0 // pred_fallthru
    _
  // Predicated region
  $region6: #{unicycle_value_function.1} parent=0 // pred_check
    _
  $region7: #{unicycle_value_function.1} parent=0 // pred_check_branch
    %16 = sbr.rel (0) target = $region9
  $region8: #{unicycle_value_function.1} parent=0 // pred_region
    _
  $region9: #{unicycle_value_function.1} parent=0 // pred_fallthru
    _
  // Predicated region
  $region10: #{unicycle_value_function.1} parent=0 // pred_check
    _
  $region11: #{unicycle_value_function.1} parent=0 // pred_check_branch
    %18 = sbr.rel (0) target = $region13
  $region12: #{unicycle_value_function.1} parent=0 // pred_region
    _
  $region13: #{unicycle_value_function.1} parent=0 // pred_fallthru
    _
  // Predicated region
  $region14: #{unicycle_value_function.1} parent=0 // pred_check
    _
  $region15: #{unicycle_value_function.1} parent=0 // pred_check_branch
    %20 = sbr.rel (0) target = $region17
  $region16: #{unicycle_value_function.1} parent=0 // pred_region
    _
  $region17: #{unicycle_value_function.1} parent=0 // pred_fallthru
    _
  // Predicated region
  $region18: #{unicycle_value_function.1} parent=0 // pred_check
    _
  $region19: #{unicycle_value_function.1} parent=0 // pred_check_branch
    %22 = sbr.rel (0) target = $region21
  $region20: #{unicycle_value_function.1} parent=0 // pred_region
    _
  $region21: #{unicycle_value_function.1} parent=0 // pred_fallthru
    _
  // Predicated region
  $region22: #{unicycle_value_function.1} parent=0 // pred_check
    _
  $region23: #{unicycle_value_function.1} parent=0 // pred_check_branch
    %24 = sbr.rel (0) target = $region25
  $region24: #{unicycle_value_function.1} parent=0 // pred_region
    _
  $region25: #{unicycle_value_function.1} parent=0 // pred_fallthru
    _
  // Predicated region
  $region26: #{unicycle_value_function.1} parent=0 // pred_check
    _
  $region27: #{unicycle_value_function.1} parent=0 // pred_check_branch
    %26 = sbr.rel (0) target = $region29
  $region28: #{unicycle_value_function.1} parent=0 // pred_region
    _
  $region29: #{unicycle_value_function.1} parent=0 // pred_fallthru
    _
  %v27 = vld [vmem:[%s0] sm:$0x7f]
  %v28 = vld [vmem:[%s1] sm:$0xff]
  %v29 = vld [vmem:[%s1 + $0x8] sm:$0xff]
  %v30 = vld [vmem:[%s1 + $0x10] sm:$0xff]
  %v31 = vld [vmem:[%s1 + $0x18] sm:$0xff]
  %v32 = vld [vmem:[%s1 + $0x20] sm:$0xff]
  %v33 = vld [vmem:[%s1 + $0x28] sm:$0xff]
  %v34 = vld [vmem:[%s1 + $0x30] sm:$0xff]
  %v35 = vld [vmem:[%s1 + $0x38] sm:$0xff]
  %v36 = vld [vmem:[%s1 + $0x40] sm:$0xff]
  %v37 = vld [vmem:[%s1 + $0x48] sm:$0xff]
  %v38 = vld [vmem:[%s1 + $0x50] sm:$0xff]
  %v39 = vld [vmem:[%s1 + $0x58] sm:$0xff]
  %v40 = vld [vmem:[%s1 + $0x60] sm:$0xff]
  %v41 = vld [vmem:[%s1 + $0x68] sm:$0xff]
  %v42 = vld [vmem:[%s1 + $0x70] sm:$0xff]
  %v43 = vld [vmem:[%s1 + $0x78] sm:$0xff]
  %v44 = vld [vmem:[%s2] sm:$0xff]
  %v45 = vld [vmem:[%s2 + $0x8] sm:$0xff]
  %v46 = vld [vmem:[%s2 + $0x10] sm:$0xff]
  %v47 = vld [vmem:[%s2 + $0x18] sm:$0xff]
  %v48 = vld [vmem:[%s2 + $0x20] sm:$0xff]
  %v49 = vld [vmem:[%s2 + $0x28] sm:$0xff]
  %v50 = vld [vmem:[%s2 + $0x30] sm:$0xff]
  %v51 = vld [vmem:[%s2 + $0x38] sm:$0xff]
  %v52 = vld [vmem:[%s2 + $0x40] sm:$0xff]
  %v53 = vld [vmem:[%s2 + $0x48] sm:$0xff]
  %v54 = vld [vmem:[%s2 + $0x50] sm:$0xff]
  %v55 = vld [vmem:[%s2 + $0x58] sm:$0xff]
  %v56 = vld [vmem:[%s2 + $0x60] sm:$0xff]
  %v57 = vld [vmem:[%s2 + $0x68] sm:$0xff]
  %v58 = vld [vmem:[%s2 + $0x70] sm:$0xff]
  %v59 = vld [vmem:[%s2 + $0x78] sm:$0xff]
  %61 = vset.pattern.permute.xlu0 0
  %62 = vperm.xlu0 %61, %v44
  %v63 = vpop.permute.xlu0 %62
  %66 = vset.pattern.permute.xlu0 0
  %67 = vperm.xlu0 %66, %v45
  %v68 = vpop.permute.xlu0 %67
  %71 = vset.pattern.permute.xlu0 0
  %72 = vperm.xlu0 %71, %v46
  %v73 = vpop.permute.xlu0 %72
  %76 = vset.pattern.permute.xlu0 0
  %77 = vperm.xlu0 %76, %v47
  %v78 = vpop.permute.xlu0 %77
  %81 = vset.pattern.permute.xlu0 0
  %82 = vperm.xlu0 %81, %v48
  %v83 = vpop.permute.xlu0 %82
  %86 = vset.pattern.permute.xlu0 0
  %87 = vperm.xlu0 %86, %v49
  %v88 = vpop.permute.xlu0 %87
  %91 = vset.pattern.permute.xlu0 0
  %92 = vperm.xlu0 %91, %v50
  %v93 = vpop.permute.xlu0 %92
  %96 = vset.pattern.permute.xlu0 0
  %97 = vperm.xlu0 %96, %v51
  %v98 = vpop.permute.xlu0 %97
  %101 = vset.pattern.permute.xlu0 0
  %102 = vperm.xlu0 %101, %v52
  %v103 = vpop.permute.xlu0 %102
  %106 = vset.pattern.permute.xlu0 0
  %107 = vperm.xlu0 %106, %v53
  %v108 = vpop.permute.xlu0 %107
  %111 = vset.pattern.permute.xlu0 0
  %112 = vperm.xlu0 %111, %v54
  %v113 = vpop.permute.xlu0 %112
  %116 = vset.pattern.permute.xlu0 0
  %117 = vperm.xlu0 %116, %v55
  %v118 = vpop.permute.xlu0 %117
  %121 = vset.pattern.permute.xlu0 0
  %122 = vperm.xlu0 %121, %v56
  %v123 = vpop.permute.xlu0 %122
  %126 = vset.pattern.permute.xlu0 0
  %127 = vperm.xlu0 %126, %v57
  %v128 = vpop.permute.xlu0 %127
  %131 = vset.pattern.permute.xlu0 0
  %132 = vperm.xlu0 %131, %v58
  %v133 = vpop.permute.xlu0 %132
  %136 = vset.pattern.permute.xlu0 0
  %137 = vperm.xlu0 %136, %v59
  %v138 = vpop.permute.xlu0 %137
  %vm140 = vcmask 56320
  %v142 = vsel %vm140, %v28, 0
  %v145 = vsel %vm140, %v29, 0
  %v148 = vsel %vm140, %v30, 0
  %v151 = vsel %vm140, %v31, 0
  %v154 = vsel %vm140, %v32, 0
  %v157 = vsel %vm140, %v33, 0
  %v160 = vsel %vm140, %v34, 0
  %v163 = vsel %vm140, %v35, 0
  %v166 = vsel %vm140, %v36, 0
  %v169 = vsel %vm140, %v37, 0
  %v172 = vsel %vm140, %v38, 0
  %v175 = vsel %vm140, %v39, 0
  %v178 = vsel %vm140, %v40, 0
  %v181 = vsel %vm140, %v41, 0
  %v184 = vsel %vm140, %v42, 0
  %v187 = vsel %vm140, %v43, 0
  %vm189 = vcmask 1046528
  %v191 = vsel %vm189, %v27, 0
  %193 = vmatprep.subr.mxu0 0.0
  %194 = vmatpush1.msra.mxu0 0.0
  %195 = vmatprep.subr.mxu0 0.0
  %196 = vmatpush1.msra.mxu0 0.0
  %197 = vmatprep.subr.mxu0 0.0
  %198 = vmatpush1.msra.mxu0 0.0
  %199 = vmatprep.subr.mxu0 0.0
  %200 = vmatpush1.msra.mxu0 0.0
  %201 = vmatprep.subr.mxu0 0.0
  %202 = vmatpush1.msra.mxu0 0.0
  %203 = vmatprep.subr.mxu0 0.0
  %204 = vmatpush1.msra.mxu0 0.0
  %205 = vmatprep.subr.mxu0 0.0
  %206 = vmatpush1.msra.mxu0 0.0
  %207 = vmatprep.subr.mxu0 0.0
  %208 = vmatpush1.msra.mxu0 0.0
  %209 = vmatprep.subr.mxu0 0.0
  %210 = vmatpush1.msra.mxu0 0.0
  %211 = vmatprep.subr.mxu0 0.0
  %212 = vmatpush1.msra.mxu0 0.0
  %213 = vmatprep.subr.mxu0 0.0
  %214 = vmatpush1.msra.mxu0 0.0
  %215 = vmatprep.subr.mxu0 0.0
  %216 = vmatpush1.msra.mxu0 0.0
  %217 = vmatprep.subr.mxu0 0.0
  %218 = vmatpush1.msra.mxu0 0.0
  %219 = vmatprep.subr.mxu0 0.0
  %220 = vmatpush1.msra.mxu0 0.0
  %221 = vmatprep.subr.mxu0 0.0
  %222 = vmatpush1.msra.mxu0 0.0
  %223 = vmatprep.subr.mxu0 0.0
  %224 = vmatpush1.msra.mxu0 %v191
  %225 = vmatprep.subr.mxu0 0.0
  %226 = vmatpush2.msra.mxu0 0.0
  %227 = vmatprep.subr.mxu0 0.0
  %228 = vmatpush2.msra.mxu0 0.0
  %229 = vmatprep.subr.mxu0 0.0
  %230 = vmatpush2.msra.mxu0 0.0
  %231 = vmatprep.subr.mxu0 0.0
  %232 = vmatpush2.msra.mxu0 0.0
  %233 = vmatprep.subr.mxu0 0.0
  %234 = vmatpush2.msra.mxu0 0.0
  %235 = vmatprep.subr.mxu0 0.0
  %236 = vmatpush2.msra.mxu0 0.0
  %237 = vmatprep.subr.mxu0 0.0
  %238 = vmatpush2.msra.mxu0 0.0
  %239 = vmatprep.subr.mxu0 0.0
  %240 = vmatpush2.msra.mxu0 0.0
  %241 = vmatprep.subr.mxu0 0.0
  %242 = vmatpush2.msra.mxu0 0.0
  %243 = vmatprep.subr.mxu0 0.0
  %244 = vmatpush2.msra.mxu0 0.0
  %245 = vmatprep.subr.mxu0 0.0
  %246 = vmatpush2.msra.mxu0 0.0
  %247 = vmatprep.subr.mxu0 0.0
  %248 = vmatpush2.msra.mxu0 0.0
  %249 = vmatprep.subr.mxu0 0.0
  %250 = vmatpush2.msra.mxu0 0.0
  %251 = vmatprep.subr.mxu0 0.0
  %252 = vmatpush2.msra.mxu0 0.0
  %253 = vmatprep.subr.mxu0 0.0
  %254 = vmatpush2.msra.mxu0 0.0
  %255 = vmatprep.subr.mxu0 0.0
  %256 = vmatpush2.msra.mxu0 0.0
  %257 = vmatprep.mubr.f32.mxu0 0.0
  %258 = vmatmul.mubr.f32.gmra.mxu0 %v142
  %v259 = vpop.f32.mrf.mxu0
  %v260 = vadd.f32 %v63, %v259
  %v261 = vpop.f32.mrf.mxu0
  %262 = vmatprep.mubr.f32.mxu0 0.0
  %263 = vmatmul.mubr.f32.gmra.mxu0 %v145
  %v264 = vpop.f32.mrf.mxu0
  %v265 = vadd.f32 %v68, %v264
  %v266 = vpop.f32.mrf.mxu0
  %267 = vmatprep.mubr.f32.mxu0 0.0
  %268 = vmatmul.mubr.f32.gmra.mxu0 %v148
  %v269 = vpop.f32.mrf.mxu0
  %v270 = vadd.f32 %v73, %v269
  %v271 = vpop.f32.mrf.mxu0
  %272 = vmatprep.mubr.f32.mxu0 0.0
  %273 = vmatmul.mubr.f32.gmra.mxu0 %v151
  %v274 = vpop.f32.mrf.mxu0
  %v275 = vadd.f32 %v78, %v274
  %v276 = vpop.f32.mrf.mxu0
  %277 = vmatprep.mubr.f32.mxu0 0.0
  %278 = vmatmul.mubr.f32.gmra.mxu0 %v154
  %v279 = vpop.f32.mrf.mxu0
  %v280 = vadd.f32 %v83, %v279
  %v281 = vpop.f32.mrf.mxu0
  %282 = vmatprep.mubr.f32.mxu0 0.0
  %283 = vmatmul.mubr.f32.gmra.mxu0 %v157
  %v284 = vpop.f32.mrf.mxu0
  %v285 = vadd.f32 %v88, %v284
  %v286 = vpop.f32.mrf.mxu0
  %287 = vmatprep.mubr.f32.mxu0 0.0
  %288 = vmatmul.mubr.f32.gmra.mxu0 %v160
  %v289 = vpop.f32.mrf.mxu0
  %v290 = vadd.f32 %v93, %v289
  %v291 = vpop.f32.mrf.mxu0
  %292 = vmatprep.mubr.f32.mxu0 0.0
  %293 = vmatmul.mubr.f32.gmra.mxu0 %v163
  %v294 = vpop.f32.mrf.mxu0
  %v295 = vadd.f32 %v98, %v294
  %v296 = vpop.f32.mrf.mxu0
  %297 = vmatprep.mubr.f32.mxu0 0.0
  %298 = vmatmul.mubr.f32.gmra.mxu0 %v166
  %v299 = vpop.f32.mrf.mxu0
  %v300 = vadd.f32 %v103, %v299
  %v301 = vpop.f32.mrf.mxu0
  %302 = vmatprep.mubr.f32.mxu0 0.0
  %303 = vmatmul.mubr.f32.gmra.mxu0 %v169
  %v304 = vpop.f32.mrf.mxu0
  %v305 = vadd.f32 %v108, %v304
  %v306 = vpop.f32.mrf.mxu0
  %307 = vmatprep.mubr.f32.mxu0 0.0
  %308 = vmatmul.mubr.f32.gmra.mxu0 %v172
  %v309 = vpop.f32.mrf.mxu0
  %v310 = vadd.f32 %v113, %v309
  %v311 = vpop.f32.mrf.mxu0
  %312 = vmatprep.mubr.f32.mxu0 0.0
  %313 = vmatmul.mubr.f32.gmra.mxu0 %v175
  %v314 = vpop.f32.mrf.mxu0
  %v315 = vadd.f32 %v118, %v314
  %v316 = vpop.f32.mrf.mxu0
  %317 = vmatprep.mubr.f32.mxu0 0.0
  %318 = vmatmul.mubr.f32.gmra.mxu0 %v178
  %v319 = vpop.f32.mrf.mxu0
  %v320 = vadd.f32 %v123, %v319
  %v321 = vpop.f32.mrf.mxu0
  %322 = vmatprep.mubr.f32.mxu0 0.0
  %323 = vmatmul.mubr.f32.gmra.mxu0 %v181
  %v324 = vpop.f32.mrf.mxu0
  %v325 = vadd.f32 %v128, %v324
  %v326 = vpop.f32.mrf.mxu0
  %327 = vmatprep.mubr.f32.mxu0 0.0
  %328 = vmatmul.mubr.f32.gmra.mxu0 %v184
  %v329 = vpop.f32.mrf.mxu0
  %v330 = vadd.f32 %v133, %v329
  %v331 = vpop.f32.mrf.mxu0
  %332 = vmatprep.mubr.f32.mxu0 0.0
  %333 = vmatmul.mubr.f32.gmra.mxu0 %v187
  %v334 = vpop.f32.mrf.mxu0
  %v335 = vadd.f32 %v138, %v334
  %v336 = vpop.f32.mrf.mxu0
  %337 = vdwg.mxu0
  %v338 = vmax.f32 %v260, 0.0
  %v339 = vmax.f32 %v265, 0.0
  %v340 = vmax.f32 %v270, 0.0
  %v341 = vmax.f32 %v275, 0.0
  %v342 = vmax.f32 %v280, 0.0
  %v343 = vmax.f32 %v285, 0.0
  %v344 = vmax.f32 %v290, 0.0
  %v345 = vmax.f32 %v295, 0.0
  %v346 = vmax.f32 %v300, 0.0
  %v347 = vmax.f32 %v305, 0.0
  %v348 = vmax.f32 %v310, 0.0
  %v349 = vmax.f32 %v315, 0.0
  %v350 = vmax.f32 %v320, 0.0
  %v351 = vmax.f32 %v325, 0.0
  %v352 = vmax.f32 %v330, 0.0
  %v353 = vmax.f32 %v335, 0.0
  %v354 = vld [vmem:[%s3] sm:$0xff]
  %v355 = vld [vmem:[%s3 + $0x8] sm:$0xff]
  %v356 = vld [vmem:[%s3 + $0x10] sm:$0xff]
  %v357 = vld [vmem:[%s3 + $0x18] sm:$0xff]
  %v358 = vld [vmem:[%s3 + $0x20] sm:$0xff]
  %v359 = vld [vmem:[%s3 + $0x28] sm:$0xff]
  %v360 = vld [vmem:[%s3 + $0x30] sm:$0xff]
  %v361 = vld [vmem:[%s3 + $0x38] sm:$0xff]
  %v362 = vld [vmem:[%s4] sm:$0xff]
  %v363 = vld [vmem:[%s4 + $0x8] sm:$0xff]
  %v364 = vld [vmem:[%s4 + $0x10] sm:$0xff]
  %v365 = vld [vmem:[%s4 + $0x18] sm:$0xff]
  %v366 = vld [vmem:[%s4 + $0x20] sm:$0xff]
  %v367 = vld [vmem:[%s4 + $0x28] sm:$0xff]
  %v368 = vld [vmem:[%s4 + $0x30] sm:$0xff]
  %v369 = vld [vmem:[%s4 + $0x38] sm:$0xff]
  %371 = vset.pattern.permute.xlu0 0
  %372 = vperm.xlu0 %371, %v362
  %v373 = vpop.permute.xlu0 %372
  %376 = vset.pattern.permute.xlu0 0
  %377 = vperm.xlu0 %376, %v363
  %v378 = vpop.permute.xlu0 %377
  %381 = vset.pattern.permute.xlu0 0
  %382 = vperm.xlu0 %381, %v364
  %v383 = vpop.permute.xlu0 %382
  %386 = vset.pattern.permute.xlu0 0
  %387 = vperm.xlu0 %386, %v365
  %v388 = vpop.permute.xlu0 %387
  %391 = vset.pattern.permute.xlu0 0
  %392 = vperm.xlu0 %391, %v366
  %v393 = vpop.permute.xlu0 %392
  %396 = vset.pattern.permute.xlu0 0
  %397 = vperm.xlu0 %396, %v367
  %v398 = vpop.permute.xlu0 %397
  %401 = vset.pattern.permute.xlu0 0
  %402 = vperm.xlu0 %401, %v368
  %v403 = vpop.permute.xlu0 %402
  %406 = vset.pattern.permute.xlu0 0
  %407 = vperm.xlu0 %406, %v369
  %v408 = vpop.permute.xlu0 %407
  %410 = vmatprep.subr.mxu0 0.0
  %411 = vmatpush1.msra.mxu0 %v353
  %412 = vmatprep.subr.mxu0 0.0
  %413 = vmatpush1.msra.mxu0 %v352
  %414 = vmatprep.subr.mxu0 0.0
  %415 = vmatpush1.msra.mxu0 %v351
  %416 = vmatprep.subr.mxu0 0.0
  %417 = vmatpush1.msra.mxu0 %v350
  %418 = vmatprep.subr.mxu0 0.0
  %419 = vmatpush1.msra.mxu0 %v349
  %420 = vmatprep.subr.mxu0 0.0
  %421 = vmatpush1.msra.mxu0 %v348
  %422 = vmatprep.subr.mxu0 0.0
  %423 = vmatpush1.msra.mxu0 %v347
  %424 = vmatprep.subr.mxu0 0.0
  %425 = vmatpush1.msra.mxu0 %v346
  %426 = vmatprep.subr.mxu0 0.0
  %427 = vmatpush1.msra.mxu0 %v345
  %428 = vmatprep.subr.mxu0 0.0
  %429 = vmatpush1.msra.mxu0 %v344
  %430 = vmatprep.subr.mxu0 0.0
  %431 = vmatpush1.msra.mxu0 %v343
  %432 = vmatprep.subr.mxu0 0.0
  %433 = vmatpush1.msra.mxu0 %v342
  %434 = vmatprep.subr.mxu0 0.0
  %435 = vmatpush1.msra.mxu0 %v341
  %436 = vmatprep.subr.mxu0 0.0
  %437 = vmatpush1.msra.mxu0 %v340
  %438 = vmatprep.subr.mxu0 0.0
  %439 = vmatpush1.msra.mxu0 %v339
  %440 = vmatprep.subr.mxu0 0.0
  %441 = vmatpush1.msra.mxu0 %v338
  %442 = vmatprep.subr.mxu0 0.0
  %443 = vmatpush2.msra.mxu0 0.0
  %444 = vmatprep.subr.mxu0 0.0
  %445 = vmatpush2.msra.mxu0 0.0
  %446 = vmatprep.subr.mxu0 0.0
  %447 = vmatpush2.msra.mxu0 0.0
  %448 = vmatprep.subr.mxu0 0.0
  %449 = vmatpush2.msra.mxu0 0.0
  %450 = vmatprep.subr.mxu0 0.0
  %451 = vmatpush2.msra.mxu0 0.0
  %452 = vmatprep.subr.mxu0 0.0
  %453 = vmatpush2.msra.mxu0 0.0
  %454 = vmatprep.subr.mxu0 0.0
  %455 = vmatpush2.msra.mxu0 0.0
  %456 = vmatprep.subr.mxu0 0.0
  %457 = vmatpush2.msra.mxu0 0.0
  %458 = vmatprep.subr.mxu0 0.0
  %459 = vmatpush2.msra.mxu0 0.0
  %460 = vmatprep.subr.mxu0 0.0
  %461 = vmatpush2.msra.mxu0 0.0
  %462 = vmatprep.subr.mxu0 0.0
  %463 = vmatpush2.msra.mxu0 0.0
  %464 = vmatprep.subr.mxu0 0.0
  %465 = vmatpush2.msra.mxu0 0.0
  %466 = vmatprep.subr.mxu0 0.0
  %467 = vmatpush2.msra.mxu0 0.0
  %468 = vmatprep.subr.mxu0 0.0
  %469 = vmatpush2.msra.mxu0 0.0
  %470 = vmatprep.subr.mxu0 0.0
  %471 = vmatpush2.msra.mxu0 0.0
  %472 = vmatprep.subr.mxu0 0.0
  %473 = vmatpush2.msra.mxu0 0.0
  %474 = vmatprep.mubr.f32.mxu0 0.0
  %475 = vmatmul.mubr.f32.gmra.mxu0 %v354
  %v476 = vpop.f32.mrf.mxu0
  %v477 = vadd.f32 %v373, %v476
  %v478 = vpop.f32.mrf.mxu0
  %479 = vmatprep.mubr.f32.mxu0 0.0
  %480 = vmatmul.mubr.f32.gmra.mxu0 %v355
  %v481 = vpop.f32.mrf.mxu0
  %v482 = vadd.f32 %v378, %v481
  %v483 = vpop.f32.mrf.mxu0
  %484 = vmatprep.mubr.f32.mxu0 0.0
  %485 = vmatmul.mubr.f32.gmra.mxu0 %v356
  %v486 = vpop.f32.mrf.mxu0
  %v487 = vadd.f32 %v383, %v486
  %v488 = vpop.f32.mrf.mxu0
  %489 = vmatprep.mubr.f32.mxu0 0.0
  %490 = vmatmul.mubr.f32.gmra.mxu0 %v357
  %v491 = vpop.f32.mrf.mxu0
  %v492 = vadd.f32 %v388, %v491
  %v493 = vpop.f32.mrf.mxu0
  %494 = vmatprep.mubr.f32.mxu0 0.0
  %495 = vmatmul.mubr.f32.gmra.mxu0 %v358
  %v496 = vpop.f32.mrf.mxu0
  %v497 = vadd.f32 %v393, %v496
  %v498 = vpop.f32.mrf.mxu0
  %499 = vmatprep.mubr.f32.mxu0 0.0
  %500 = vmatmul.mubr.f32.gmra.mxu0 %v359
  %v501 = vpop.f32.mrf.mxu0
  %v502 = vadd.f32 %v398, %v501
  %v503 = vpop.f32.mrf.mxu0
  %504 = vmatprep.mubr.f32.mxu0 0.0
  %505 = vmatmul.mubr.f32.gmra.mxu0 %v360
  %v506 = vpop.f32.mrf.mxu0
  %v507 = vadd.f32 %v403, %v506
  %v508 = vpop.f32.mrf.mxu0
  %509 = vmatprep.mubr.f32.mxu0 0.0
  %510 = vmatmul.mubr.f32.gmra.mxu0 %v361
  %v511 = vpop.f32.mrf.mxu0
  %v512 = vadd.f32 %v408, %v511
  %v513 = vpop.f32.mrf.mxu0
  %514 = vdwg.mxu0
  %v515 = vmax.f32 %v477, 0.0
  %v516 = vmax.f32 %v482, 0.0
  %v517 = vmax.f32 %v487, 0.0
  %v518 = vmax.f32 %v492, 0.0
  %v519 = vmax.f32 %v497, 0.0
  %v520 = vmax.f32 %v502, 0.0
  %v521 = vmax.f32 %v507, 0.0
  %v522 = vmax.f32 %v512, 0.0
  %v523 = vld [vmem:[%s5] sm:$0xff]
  %v524 = vld [vmem:[%s5 + $0x8] sm:$0xff]
  %v525 = vld [vmem:[%s5 + $0x10] sm:$0xff]
  %v526 = vld [vmem:[%s5 + $0x18] sm:$0xff]
  %v527 = vld [vmem:[%s5 + $0x20] sm:$0xff]
  %v528 = vld [vmem:[%s5 + $0x28] sm:$0xff]
  %v529 = vld [vmem:[%s5 + $0x30] sm:$0xff]
  %v530 = vld [vmem:[%s5 + $0x38] sm:$0xff]
  %532 = vset.pattern.permute.xlu0 0
  %533 = vperm.xlu0 %532, %v523
  %v534 = vpop.permute.xlu0 %533
  %537 = vset.pattern.permute.xlu0 0
  %538 = vperm.xlu0 %537, %v524
  %v539 = vpop.permute.xlu0 %538
  %542 = vset.pattern.permute.xlu0 0
  %543 = vperm.xlu0 %542, %v525
  %v544 = vpop.permute.xlu0 %543
  %547 = vset.pattern.permute.xlu0 0
  %548 = vperm.xlu0 %547, %v526
  %v549 = vpop.permute.xlu0 %548
  %552 = vset.pattern.permute.xlu0 0
  %553 = vperm.xlu0 %552, %v527
  %v554 = vpop.permute.xlu0 %553
  %557 = vset.pattern.permute.xlu0 0
  %558 = vperm.xlu0 %557, %v528
  %v559 = vpop.permute.xlu0 %558
  %562 = vset.pattern.permute.xlu0 0
  %563 = vperm.xlu0 %562, %v529
  %v564 = vpop.permute.xlu0 %563
  %567 = vset.pattern.permute.xlu0 0
  %568 = vperm.xlu0 %567, %v530
  %v569 = vpop.permute.xlu0 %568
  %v571 = vmul.f32 %v515, %v534
  %v572 = vmul.f32 %v516, %v539
  %v573 = vmul.f32 %v517, %v544
  %v574 = vmul.f32 %v518, %v549
  %v575 = vmul.f32 %v519, %v554
  %v576 = vmul.f32 %v520, %v559
  %v577 = vmul.f32 %v521, %v564
  %v578 = vmul.f32 %v522, %v569
  %vm579 = vcmask 130048
  %v580 = vsel %vm579, %v571, 0.0
  %v581 = vsel %vm579, %v572, 0.0
  %v582 = vadd.f32 %v580, %v581
  %v583 = vsel %vm579, %v573, 0.0
  %v584 = vadd.f32 %v582, %v583
  %v585 = vsel %vm579, %v574, 0.0
  %v586 = vadd.f32 %v584, %v585
  %v587 = vsel %vm579, %v575, 0.0
  %v588 = vadd.f32 %v586, %v587
  %v589 = vsel %vm579, %v576, 0.0
  %v590 = vadd.f32 %v588, %v589
  %v591 = vsel %vm579, %v577, 0.0
  %v592 = vadd.f32 %v590, %v591
  %v593 = vsel %vm579, %v578, 0.0
  %v594 = vadd.f32 %v592, %v593
  %v595 = vrot.slane %v594, 4
  %v596 = vadd.f32 %v594, %v595
  %v597 = vrot.slane %v596, 2
  %v598 = vadd.f32 %v596, %v597
  %v599 = vrot.slane %v598, 1
  %v600 = vadd.f32 %v598, %v599
  %s601 = sld [smem:[#allocation2]]
  %v602 = vstv %s601
  %v603 = vadd.f32 %v600, %v602
  %vm604 = vcmask 122880
  %605 = vst.msk [vmem:[%s7] sm:$0x1] %vm604, %v603
  // Predicated region
  $region30: #{unicycle_value_function.1} parent=0 // pred_check
    _
  $region31: #{unicycle_value_function.1} parent=0 // pred_check_branch
    %607 = sbr.rel (0) target = $region33
  $region32: #{unicycle_value_function.1} parent=0 // pred_region
    _
  $region33: #{unicycle_value_function.1} parent=0 // pred_fallthru
    _
  // Predicated region
  $region34: #{unicycle_value_function.1} parent=0 // pred_check
    _
  $region35: #{unicycle_value_function.1} parent=0 // pred_check_branch
    %609 = sbr.rel (0) target = $region37
  $region36: #{unicycle_value_function.1} parent=0 // pred_region
    _
  $region37: #{unicycle_value_function.1} parent=0 // pred_fallthru
    _

</llo_original>
